<compile_context>
chip_gen: v7x
topology: tpu7x:2x2x1
jax: 0.10.0
libtpu: 0.0.40
codegen_flags: <defaults>
</compile_context>

<pallas_src>
import functools

import jax
import jax.numpy as jnp
from jax.experimental import pallas as pl
from jax.experimental.pallas import tpu as pltpu


def _mlp_kernel(x_ref, w1_ref, b1_ref, w2_ref, b2_ref, o_ref):
    # fc1: x[B, in] contracted with w1[hidden, in] over dim 1 of both
    # (== x @ w1.T) -- MXU takes the transposed operand for free.
    h = jax.lax.dot_general(
        x_ref[...], w1_ref[...],
        dimension_numbers=(((1,), (1,)), ((), ())),
        preferred_element_type=jnp.float32,
    )
    h = jnp.maximum(h + b1_ref[...], 0.0)          # bias + ReLU in f32 (VPU)

    # fc2: h[B, hidden] contracted with w2[out, hidden] over dim 1 of both.
    # Cast h to the weight dtype so both MXU operands match (bf16 path).
    out = jax.lax.dot_general(
        h.astype(w2_ref.dtype), w2_ref[...],
        dimension_numbers=(((1,), (1,)), ((), ())),
        preferred_element_type=jnp.float32,
    )
    o_ref[...] = (out + b2_ref[...]).astype(o_ref.dtype)


def neural_network_forward(x, w1, b1, w2, b2, *, batch_tile=512, use_bf16=False):
    """Forward pass of NeuralNetwork (PyTorch nn.Linear conventions).

    x:  [B, input]
    w1: [hidden, input], b1: [hidden]
    w2: [output, hidden], b2: [output]
    """
    B, in_f = x.shape
    hidden, _ = w1.shape
    out_f, _ = w2.shape

    # Biases as [1, F] rows for 2-D broadcast in the kernel.  Under jit these
    # reshapes fuse away (do them once at parameter-load time in production).
    b1_2d = b1.reshape(1, hidden).astype(jnp.float32)
    b2_2d = b2.reshape(1, out_f).astype(jnp.float32)

    if use_bf16:
        # bf16 MXU operands, f32 accumulation (preferred_element_type above).
        x_in = x.astype(jnp.bfloat16)
        w1_in = w1.astype(jnp.bfloat16)
        w2_in = w2.astype(jnp.bfloat16)
    else:
        x_in, w1_in, w2_in = x, w1, w2

    out_shape = jax.ShapeDtypeStruct((B, out_f), x.dtype)

    if B <= batch_tile:
        # Small problem: one invocation, everything VMEM-resident, no grid ->
        # no pipeline machinery at all.
        return pl.pallas_call(
            _mlp_kernel,
            out_shape=out_shape,
            in_specs=[pl.BlockSpec(memory_space=pltpu.MemorySpace.VMEM)] * 5,
            out_specs=pl.BlockSpec(memory_space=pltpu.MemorySpace.VMEM),
        )(x_in, w1_in, b1_2d, w2_in, b2_2d)

    # Large batch: tile only the batch axis.  Weights/biases use a constant
    # index_map so they are fetched once and stay VMEM-resident across tiles.
    # TODO(synk): for production shapes with a tiny output width and huge
    # batch, emit a lane-dense (padded/transposed) output slab and K-tile the
    # contraction with a VMEM accumulator to respect v7x's 64 MiB VMEM.
    grid = (pl.cdiv(B, batch_tile),)
    return pl.pallas_call(
        _mlp_kernel,
        out_shape=out_shape,
        grid_spec=pl.GridSpec(
            grid=grid,
            in_specs=[
                pl.BlockSpec((batch_tile, in_f), lambda i: (i, 0)),
                pl.BlockSpec((hidden, in_f), lambda i: (0, 0)),
                pl.BlockSpec((1, hidden), lambda i: (0, 0)),
                pl.BlockSpec((out_f, hidden), lambda i: (0, 0)),
                pl.BlockSpec((1, out_f), lambda i: (0, 0)),
            ],
            out_specs=pl.BlockSpec((batch_tile, out_f), lambda i: (i, 0)),
        ),
        compiler_params=pltpu.CompilerParams(
            dimension_semantics=("parallel",),   # shard batch tiles over TCs (v7x)
        ),
    )(x_in, w1_in, b1_2d, w2_in, b2_2d)


if __name__ == "__main__":
    # Small shapes consistent with the module's forward.
    batch, input_size, hidden_size, output_size = 8, 16, 32, 4

    key = jax.random.PRNGKey(0)
    kx, k1, k2, k3, k4 = jax.random.split(key, 5)

    x = jax.random.normal(kx, (batch, input_size), dtype=jnp.float32)
    w1 = jax.random.normal(k1, (hidden_size, input_size), dtype=jnp.float32) * 0.1
    b1 = jax.random.normal(k2, (hidden_size,), dtype=jnp.float32) * 0.1
    w2 = jax.random.normal(k3, (output_size, hidden_size), dtype=jnp.float32) * 0.1
    b2 = jax.random.normal(k4, (output_size,), dtype=jnp.float32) * 0.1

    # jit so the tiny bias reshapes fuse into the surrounding graph.
    fwd = jax.jit(functools.partial(neural_network_forward, use_bf16=False))
    out = fwd(x, w1, b1, w2, b2)
    jax.block_until_ready(out)

    # Reference check against plain JAX (matches the PyTorch forward).
    ref = jnp.maximum(x @ w1.T + b1, 0.0) @ w2.T + b2
    assert out.shape == (batch, output_size)
    assert jnp.allclose(out, ref, atol=1e-5), "mismatch vs reference"

    print("KERNEL_OK")
</pallas_src>

<mosaic_0001>
module attributes {stable_mosaic.version = 11 : i64} {
  func.func @_mlp_kernel(%arg0: memref<8x16xf32, #tpu.memory_space<vmem>>, %arg1: memref<32x16xf32, #tpu.memory_space<vmem>>, %arg2: memref<1x32xf32, #tpu.memory_space<vmem>>, %arg3: memref<4x32xf32, #tpu.memory_space<vmem>>, %arg4: memref<1x4xf32, #tpu.memory_space<vmem>>, %arg5: memref<8x4xf32, #tpu.memory_space<vmem>>) attributes {dimension_semantics = [], scalar_prefetch = 0 : i64, scratch_operands = 0 : i64, tpu.core_type = #tpu.core_type<tc>} {
    %c0 = arith.constant 0 : index
    %c0_0 = arith.constant 0 : index
    %0 = vector.load %arg0[%c0, %c0_0] : memref<8x16xf32, #tpu.memory_space<vmem>>, vector<8x16xf32>
    %c0_1 = arith.constant 0 : index
    %c0_2 = arith.constant 0 : index
    %1 = vector.load %arg1[%c0_1, %c0_2] : memref<32x16xf32, #tpu.memory_space<vmem>>, vector<32x16xf32>
    %cst = arith.constant dense<0.000000e+00> : vector<8x32xf32>
    %2 = tpu.matmul %0, %1, %cst {dimension_numbers = #tpu.dot_dimension_numbers<[1], [1], [0], [0], [0, 0, 1, 0], [], []>} : vector<8x16xf32>, vector<32x16xf32>, vector<8x32xf32> -> vector<8x32xf32>
    %c0_3 = arith.constant 0 : index
    %c0_4 = arith.constant 0 : index
    %3 = vector.load %arg2[%c0_3, %c0_4] : memref<1x32xf32, #tpu.memory_space<vmem>>, vector<1x32xf32>
    %4 = vector.broadcast %3 : vector<1x32xf32> to vector<8x32xf32>
    %5 = arith.addf %2, %4 : vector<8x32xf32>
    %cst_5 = arith.constant 0.000000e+00 : f32
    %6 = vector.broadcast %cst_5 : f32 to vector<8x32xf32>
    %7 = arith.maximumf %5, %6 : vector<8x32xf32>
    %c0_6 = arith.constant 0 : index
    %c0_7 = arith.constant 0 : index
    %8 = vector.load %arg3[%c0_6, %c0_7] : memref<4x32xf32, #tpu.memory_space<vmem>>, vector<4x32xf32>
    %cst_8 = arith.constant dense<0.000000e+00> : vector<8x4xf32>
    %9 = tpu.matmul %7, %8, %cst_8 {dimension_numbers = #tpu.dot_dimension_numbers<[1], [1], [0], [0], [0, 0, 1, 0], [], []>} : vector<8x32xf32>, vector<4x32xf32>, vector<8x4xf32> -> vector<8x4xf32>
    %c0_9 = arith.constant 0 : index
    %c0_10 = arith.constant 0 : index
    %10 = vector.load %arg4[%c0_9, %c0_10] : memref<1x4xf32, #tpu.memory_space<vmem>>, vector<1x4xf32>
    %11 = vector.broadcast %10 : vector<1x4xf32> to vector<8x4xf32>
    %12 = arith.addf %9, %11 : vector<8x4xf32>
    %c0_11 = arith.constant 0 : index
    %c0_12 = arith.constant 0 : index
    %13 = vector.load %arg5[%c0_11, %c0_12] : memref<8x4xf32, #tpu.memory_space<vmem>>, vector<8x4xf32>
    tpu.vector_store %arg5[%c0_11, %c0_12], %12 {strides = array<i32>} : memref<8x4xf32, #tpu.memory_space<vmem>>, vector<8x4xf32>,
    return
  }
}

</mosaic_0001>

<llo_original>
// kernel: neural_network_forward.1
$region0: #{neural_network_forward.1}
  #allocation0 [shape = 'u32[]', space=smem, size = 0x4, offset = 0x4, fixed_abs, tag = 'smem constant byte address 0x4 - core index']
  #allocation1 [shape = 'u32[144,128]{1,0:T(1,128)}', space=vmem, size = 0x12000, scoped, tag = 'internal scratch']
  %s0 = inlined_call_operand.vmem [shape: f32[8,16], index: 0, kind: input, shape index: {}]
  %s1 = inlined_call_operand.vmem [shape: f32[32,16], index: 1, kind: input, shape index: {}]
  %s2 = inlined_call_operand.vmem [shape: f32[1,32], index: 2, kind: input, shape index: {}]
  %s3 = inlined_call_operand.vmem [shape: f32[4,32], index: 3, kind: input, shape index: {}]
  %s4 = inlined_call_operand.vmem [shape: f32[1,4], index: 4, kind: input, shape index: {}]
  %s5 = inlined_call_operand.vmem [shape: f32[8,4], index: 5, kind: output, shape index: {}]
  %s6 = sld [smem:[#allocation0]]
  $region30: #{neural_network_forward.1} parent=0
    _
  %s8 = ssub.s32 1, %s6
  %s9 = scalar_select 0, %s8, %s6
  // Predicated region
  $region2: #{neural_network_forward.1} parent=0 // pred_check
    _
  $region3: #{neural_network_forward.1} parent=0 // pred_check_branch
    %11 = sbr.rel (0) target = $region5
  $region4: #{neural_network_forward.1} parent=0 // pred_region
    _
  $region5: #{neural_network_forward.1} parent=0 // pred_fallthru
    _
  // Predicated region
  $region6: #{neural_network_forward.1} parent=0 // pred_check
    _
  $region7: #{neural_network_forward.1} parent=0 // pred_check_branch
    %13 = sbr.rel (0) target = $region9
  $region8: #{neural_network_forward.1} parent=0 // pred_region
    _
  $region9: #{neural_network_forward.1} parent=0 // pred_fallthru
    _
  // Predicated region
  $region10: #{neural_network_forward.1} parent=0 // pred_check
    _
  $region11: #{neural_network_forward.1} parent=0 // pred_check_branch
    %15 = sbr.rel (0) target = $region13
  $region12: #{neural_network_forward.1} parent=0 // pred_region
    _
  $region13: #{neural_network_forward.1} parent=0 // pred_fallthru
    _
  // Predicated region
  $region14: #{neural_network_forward.1} parent=0 // pred_check
    _
  $region15: #{neural_network_forward.1} parent=0 // pred_check_branch
    %17 = sbr.rel (0) target = $region17
  $region16: #{neural_network_forward.1} parent=0 // pred_region
    _
  $region17: #{neural_network_forward.1} parent=0 // pred_fallthru
    _
  // Predicated region
  $region18: #{neural_network_forward.1} parent=0 // pred_check
    _
  $region19: #{neural_network_forward.1} parent=0 // pred_check_branch
    %19 = sbr.rel (0) target = $region21
  $region20: #{neural_network_forward.1} parent=0 // pred_region
    _
  $region21: #{neural_network_forward.1} parent=0 // pred_fallthru
    _
  %v20 = vld [vmem:[%s0] sm:$0xff]
  %v21 = vld [vmem:[%s1] sm:$0xff]
  %v22 = vld [vmem:[%s1 + $0x8] sm:$0xff]
  %v23 = vld [vmem:[%s1 + $0x10] sm:$0xff]
  %v24 = vld [vmem:[%s1 + $0x18] sm:$0xff]
  %v25 = vld [vmem:[%s2] sm:$0x1]
  %v27 = vlaneseq
  %v28 = vshrl.u32 %v27, 7
  %v29 = vsub.s32 0, %v28
  %v30 = vrot.slane %v25, %v29
  %vm32 = vcmask 130048
  %v34 = vsel %vm32, %v20, 0
  %v37 = vsel %vm32, %v21, 0
  %v40 = vsel %vm32, %v22, 0
  %v43 = vsel %vm32, %v23, 0
  %v46 = vsel %vm32, %v24, 0
  %48 = vmatprep.subr.mxu0 0.0
  %49 = vmatpush1.xpose.msra.mxu0 %v37
  %50 = vmatprep.subr.mxu0 0.0
  %51 = vmatpush1.xpose.msra.mxu0 %v40
  %52 = vmatprep.subr.mxu0 0.0
  %53 = vmatpush1.xpose.msra.mxu0 %v43
  %54 = vmatprep.subr.mxu0 0.0
  %55 = vmatpush1.xpose.msra.mxu0 %v46
  %56 = vmatprep.subr.mxu0 0.0
  %57 = vmatpush1.xpose.msra.mxu0 0.0
  %58 = vmatprep.subr.mxu0 0.0
  %59 = vmatpush1.xpose.msra.mxu0 0.0
  %60 = vmatprep.subr.mxu0 0.0
  %61 = vmatpush1.xpose.msra.mxu0 0.0
  %62 = vmatprep.subr.mxu0 0.0
  %63 = vmatpush1.xpose.msra.mxu0 0.0
  %64 = vmatprep.subr.mxu0 0.0
  %65 = vmatpush1.xpose.msra.mxu0 0.0
  %66 = vmatprep.subr.mxu0 0.0
  %67 = vmatpush1.xpose.msra.mxu0 0.0
  %68 = vmatprep.subr.mxu0 0.0
  %69 = vmatpush1.xpose.msra.mxu0 0.0
  %70 = vmatprep.subr.mxu0 0.0
  %71 = vmatpush1.xpose.msra.mxu0 0.0
  %72 = vmatprep.subr.mxu0 0.0
  %73 = vmatpush1.xpose.msra.mxu0 0.0
  %74 = vmatprep.subr.mxu0 0.0
  %75 = vmatpush1.xpose.msra.mxu0 0.0
  %76 = vmatprep.subr.mxu0 0.0
  %77 = vmatpush1.xpose.msra.mxu0 0.0
  %78 = vmatprep.subr.mxu0 0.0
  %79 = vmatpush1.xpose.msra.mxu0 0.0
  %80 = vmatprep.subr.mxu0 0.0
  %81 = vmatpush1.xpose.msra.mxu0 0.0
  %82 = vmatprep.subr.mxu0 0.0
  %83 = vmatpush1.xpose.msra.mxu0 0.0
  %84 = vmatprep.subr.mxu0 0.0
  %85 = vmatpush1.xpose.msra.mxu0 0.0
  %86 = vmatprep.subr.mxu0 0.0
  %87 = vmatpush1.xpose.msra.mxu0 0.0
  %88 = vmatprep.subr.mxu0 0.0
  %89 = vmatpush1.xpose.msra.mxu0 0.0
  %90 = vmatprep.subr.mxu0 0.0
  %91 = vmatpush1.xpose.msra.mxu0 0.0
  %92 = vmatprep.subr.mxu0 0.0
  %93 = vmatpush1.xpose.msra.mxu0 0.0
  %94 = vmatprep.subr.mxu0 0.0
  %95 = vmatpush1.xpose.msra.mxu0 0.0
  %96 = vmatprep.subr.mxu0 0.0
  %97 = vmatpush1.xpose.msra.mxu0 0.0
  %98 = vmatprep.subr.mxu0 0.0
  %99 = vmatpush1.xpose.msra.mxu0 0.0
  %100 = vmatprep.subr.mxu0 0.0
  %101 = vmatpush1.xpose.msra.mxu0 0.0
  %102 = vmatprep.subr.mxu0 0.0
  %103 = vmatpush1.xpose.msra.mxu0 0.0
  %104 = vmatprep.subr.mxu0 0.0
  %105 = vmatpush1.xpose.msra.mxu0 0.0
  %106 = vmatprep.subr.mxu0 0.0
  %107 = vmatpush1.xpose.msra.mxu0 0.0
  %108 = vmatprep.subr.mxu0 0.0
  %109 = vmatpush1.xpose.msra.mxu0 0.0
  %110 = vmatprep.subr.mxu0 0.0
  %111 = vmatpush1.xpose.msra.mxu0 0.0
  %112 = vmatprep.mubr.f32.mxu0 0.0
  %113 = vmatmul.mubr.f32.gmra.mrb[0].mxu0 %v34
  %v114 = vpop.f32.mrb[0].mxu0
  %v115 = vadd.f32 %v30, %v114
  %v116 = vpop.f32.mrb[0].mxu0
  %117 = vdwg.mxu0
  %v118 = vmax.f32 %v115, 0.0
  %v119 = vld [vmem:[%s3] sm:$0xf]
  %v120 = vld [vmem:[%s4] sm:$0x1]
  %v122 = vlaneseq
  %v123 = vshrl.u32 %v122, 7
  %v124 = vsub.s32 0, %v123
  %v125 = vrot.slane %v120, %v124
  %vm127 = vcmask 261120
  %v129 = vsel %vm127, %v118, 0
  %v132 = vsel %vm127, %v119, 0
  %134 = vmatprep.subr.mxu0 0.0
  %135 = vmatpush1.xpose.msra.mxu0 %v132
  %136 = vmatprep.subr.mxu0 0.0
  %137 = vmatpush1.xpose.msra.mxu0 0.0
  %138 = vmatprep.subr.mxu0 0.0
  %139 = vmatpush1.xpose.msra.mxu0 0.0
  %140 = vmatprep.subr.mxu0 0.0
  %141 = vmatpush1.xpose.msra.mxu0 0.0
  %142 = vmatprep.subr.mxu0 0.0
  %143 = vmatpush1.xpose.msra.mxu0 0.0
  %144 = vmatprep.subr.mxu0 0.0
  %145 = vmatpush1.xpose.msra.mxu0 0.0
  %146 = vmatprep.subr.mxu0 0.0
  %147 = vmatpush1.xpose.msra.mxu0 0.0
  %148 = vmatprep.subr.mxu0 0.0
  %149 = vmatpush1.xpose.msra.mxu0 0.0
  %150 = vmatprep.subr.mxu0 0.0
  %151 = vmatpush1.xpose.msra.mxu0 0.0
  %152 = vmatprep.subr.mxu0 0.0
  %153 = vmatpush1.xpose.msra.mxu0 0.0
  %154 = vmatprep.subr.mxu0 0.0
  %155 = vmatpush1.xpose.msra.mxu0 0.0
  %156 = vmatprep.subr.mxu0 0.0
  %157 = vmatpush1.xpose.msra.mxu0 0.0
  %158 = vmatprep.subr.mxu0 0.0
  %159 = vmatpush1.xpose.msra.mxu0 0.0
  %160 = vmatprep.subr.mxu0 0.0
  %161 = vmatpush1.xpose.msra.mxu0 0.0
  %162 = vmatprep.subr.mxu0 0.0
  %163 = vmatpush1.xpose.msra.mxu0 0.0
  %164 = vmatprep.subr.mxu0 0.0
  %165 = vmatpush1.xpose.msra.mxu0 0.0
  %166 = vmatprep.subr.mxu0 0.0
  %167 = vmatpush1.xpose.msra.mxu0 0.0
  %168 = vmatprep.subr.mxu0 0.0
  %169 = vmatpush1.xpose.msra.mxu0 0.0
  %170 = vmatprep.subr.mxu0 0.0
  %171 = vmatpush1.xpose.msra.mxu0 0.0
  %172 = vmatprep.subr.mxu0 0.0
  %173 = vmatpush1.xpose.msra.mxu0 0.0
  %174 = vmatprep.subr.mxu0 0.0
  %175 = vmatpush1.xpose.msra.mxu0 0.0
  %176 = vmatprep.subr.mxu0 0.0
  %177 = vmatpush1.xpose.msra.mxu0 0.0
  %178 = vmatprep.subr.mxu0 0.0
  %179 = vmatpush1.xpose.msra.mxu0 0.0
  %180 = vmatprep.subr.mxu0 0.0
  %181 = vmatpush1.xpose.msra.mxu0 0.0
  %182 = vmatprep.subr.mxu0 0.0
  %183 = vmatpush1.xpose.msra.mxu0 0.0
  %184 = vmatprep.subr.mxu0 0.0
  %185 = vmatpush1.xpose.msra.mxu0 0.0
  %186 = vmatprep.subr.mxu0 0.0
  %187 = vmatpush1.xpose.msra.mxu0 0.0
  %188 = vmatprep.subr.mxu0 0.0
  %189 = vmatpush1.xpose.msra.mxu0 0.0
  %190 = vmatprep.subr.mxu0 0.0
  %191 = vmatpush1.xpose.msra.mxu0 0.0
  %192 = vmatprep.subr.mxu0 0.0
  %193 = vmatpush1.xpose.msra.mxu0 0.0
  %194 = vmatprep.subr.mxu0 0.0
  %195 = vmatpush1.xpose.msra.mxu0 0.0
  %196 = vmatprep.subr.mxu0 0.0
  %197 = vmatpush1.xpose.msra.mxu0 0.0
  %198 = vmatprep.mubr.f32.mxu0 0.0
  %199 = vmatmul.mubr.f32.gmra.mrb[0].mxu0 %v129
  %v200 = vpop.f32.mrb[0].mxu0
  %v201 = vadd.f32 %v125, %v200
  %v202 = vpop.f32.mrb[0].mxu0
  %203 = vdwg.mxu0
  %vm204 = vcmask 31744
  %205 = vst.msk [vmem:[%s5] sm:$0xff] %vm204, %v201
  // Predicated region
  $region22: #{neural_network_forward.1} parent=0 // pred_check
    _
  $region23: #{neural_network_forward.1} parent=0 // pred_check_branch
    %207 = sbr.rel (0) target = $region25
  $region24: #{neural_network_forward.1} parent=0 // pred_region
    _
  $region25: #{neural_network_forward.1} parent=0 // pred_fallthru
    _
  // Predicated region
  $region26: #{neural_network_forward.1} parent=0 // pred_check
    _
  $region27: #{neural_network_forward.1} parent=0 // pred_check_branch
    %209 = sbr.rel (0) target = $region29
  $region28: #{neural_network_forward.1} parent=0 // pred_region
    _
  $region29: #{neural_network_forward.1} parent=0 // pred_fallthru
    _

</llo_original>
